<compile_context>
chip_gen: v5e
topology: v5e:2x2
jax: 0.10.0
libtpu: 0.0.40
codegen_flags: <defaults>
</compile_context>

<pallas_src>
import math
from functools import partial

import numpy as np
import jax
import jax.numpy as jnp
from jax.experimental import pallas as pl
from jax.experimental.pallas import tpu as pltpu

_BN_EPS = 1e-5


def _round_up(n, m):
    return ((n + m - 1) // m) * m


# ---------------------------------------------------------------------------
# Pallas kernel: Actor MLP (BN already folded into the Linear params)
# ---------------------------------------------------------------------------
def _actor_kernel(x_ref,
                  w1_ref, b1_ref, w2_ref, b2_ref, w3_ref, b3_ref,
                  out_ref, *, max_action):
    # f32 -> bf16 cast done in-kernel (no wrapper-side materialization of x).
    x = x_ref[...].astype(w1_ref.dtype)                         # (TB, IN) bf16
    h = jnp.dot(x, w1_ref[...], preferred_element_type=jnp.float32) + b1_ref[...]
    h = jnp.maximum(h, 0.0).astype(w2_ref.dtype)                # ReLU f32, bf16 for MXU
    h = jnp.dot(h, w2_ref[...], preferred_element_type=jnp.float32) + b2_ref[...]
    h = jnp.maximum(h, 0.0).astype(w3_ref.dtype)
    h = jnp.dot(h, w3_ref[...], preferred_element_type=jnp.float32) + b3_ref[...]
    t = jnp.tanh(h)                                             # EUP slot (free-ish)
    if max_action != 1.0:                                       # static skip when 1.0
        t = max_action * t
    out_ref[...] = t.astype(out_ref.dtype)                      # bf16 store


# ---------------------------------------------------------------------------
# Wrapper: flatten, batch-tiled pallas_call (no batch/feature padding)
# ---------------------------------------------------------------------------
def actor_forward(packed, x, *, conv_output_dim, action_dim, max_action,
                  batch_tile=2048):
    w1, b1, w2, b2, w3, b3 = packed
    in_dim = w1.shape[0]          # natural conv_output_dim (no feature pad)
    out_p = w3.shape[1]           # padded output dim (multiple of 128)
    assert in_dim == conv_output_dim

    assert int(np.prod(x.shape)) % conv_output_dim == 0, \
        "x does not flatten evenly into conv_output_dim"
    xf = x.reshape(-1, conv_output_dim)          # x.view(-1, conv_output_dim); stays f32
    batch = xf.shape[0]

    # Batch tile selection:
    #  * small batches: a single full-array tile (full-dim exception covers
    #    any batch size, no padding needed).
    #  * large batches: tile rounded to a multiple of 16 (f32 + bf16 safe),
    #    capped at ceil(batch/2) so the grid has >= 2 steps (v7x megacore).
    #    Partial last tile handled by Pallas; no batch padding.
    if batch <= batch_tile and batch <= 1024:
        tb = batch
    else:
        tb = min(_round_up(min(batch_tile, batch), 16),
                 _round_up(pl.cdiv(batch, 2), 16))
    grid = pl.cdiv(batch, tb)

    const = lambda i: (0, 0)      # weights/biases resident across the grid
    out = pl.pallas_call(
        partial(_actor_kernel, max_action=float(max_action)),
        out_shape=jax.ShapeDtypeStruct((batch, out_p), jnp.bfloat16),
        grid_spec=pltpu.PrefetchScalarGridSpec(
            num_scalar_prefetch=0,
            grid=(grid,),
            in_specs=[pl.BlockSpec((tb, in_dim), lambda i: (i, 0)),
                      pl.BlockSpec(w1.shape, const), pl.BlockSpec(b1.shape, const),
                      pl.BlockSpec(w2.shape, const), pl.BlockSpec(b2.shape, const),
                      pl.BlockSpec(w3.shape, const), pl.BlockSpec(b3.shape, const)],
            out_specs=pl.BlockSpec((tb, out_p), lambda i: (i, 0)),
        ),
        compiler_params=pltpu.CompilerParams(
            dimension_semantics=("parallel",),       # megacore split on v7x
            vmem_limit_bytes=32 << 20),
    )(xf, w1, b1, w2, b2, w3, b3)
    # Slice the real action lanes and return f32 (matches the PyTorch module).
    return out[:, :action_dim].astype(jnp.float32)


# ---------------------------------------------------------------------------
# Deterministic PyTorch-convention init (Linear W is (out,in); BN has
# gamma/beta/running_mean/running_var), and a pack step that folds eval-mode
# BN into the Linears, transposes to (in,out), zero-pads hidden/output dims,
# and casts weights to bf16.  The conv feature dim is kept at its natural
# width (no 128 pad) - the input block uses the full-dim exception.
# ---------------------------------------------------------------------------
def init_actor_params(key, conv_output_dim, action_dim, hidden=200):
    def linear(k, fan_in, fan_out):
        kw, kb = jax.random.split(k)
        bound = 1.0 / math.sqrt(fan_in)
        w = jax.random.uniform(kw, (fan_out, fan_in), jnp.float32, -bound, bound)
        b = jax.random.uniform(kb, (fan_out,), jnp.float32, -bound, bound)
        return w, b

    def batchnorm(k, n):
        kg, kb, km, kv = jax.random.split(k, 4)
        gamma = 1.0 + 0.1 * jax.random.normal(kg, (n,), jnp.float32)
        beta = 0.1 * jax.random.normal(kb, (n,), jnp.float32)
        mean = 0.1 * jax.random.normal(km, (n,), jnp.float32)
        var = jnp.abs(1.0 + 0.1 * jax.random.normal(kv, (n,), jnp.float32))
        return gamma, beta, mean, var

    dims = [(conv_output_dim, hidden), (hidden, hidden), (hidden, action_dim)]
    layers = []
    for (fi, fo) in dims:
        key, kbn, klin = jax.random.split(key, 3)
        layers.append({"bn": batchnorm(kbn, fi), "lin": linear(klin, fi, fo)})
    return layers


def pack_actor_params(raw, *, hid_pad=256, out_pad=128):
    packed = []
    n = len(raw)
    for li, layer in enumerate(raw):
        gamma, beta, mean, var = layer["bn"]
        w, b = layer["lin"]                          # (out, in), (out,)
        scale = gamma / jnp.sqrt(var + _BN_EPS)      # eval-mode BN as affine
        shift = beta - mean * scale
        w_fold = (w * scale[None, :]).T              # (in, out), BN folded in
        b_fold = b + w @ shift
        fi, fo = w_fold.shape
        ip = fi if li == 0 else hid_pad              # conv feature dim stays natural
        op = out_pad if li == n - 1 else hid_pad
        w_p = jnp.zeros((ip, op), jnp.float32).at[:fi, :fo].set(w_fold)
        b_p = jnp.zeros((1, op), jnp.float32).at[0, :fo].set(b_fold)
        packed += [w_p.astype(jnp.bfloat16), b_p]    # bf16 weights, f32 bias
        # Note: the last-layer matmul could be kept f32 if tighter accuracy is
        # ever needed; bf16 is well within the policy-network tolerance here.
    return packed


# ---------------------------------------------------------------------------
# Pure-JAX reference (eval-mode BN, unfolded, f32) for a correctness check
# ---------------------------------------------------------------------------
def actor_reference(raw, x, *, conv_output_dim, max_action):
    h = x.reshape(-1, conv_output_dim).astype(jnp.float32)
    for i, layer in enumerate(raw):
        gamma, beta, mean, var = layer["bn"]
        w, b = layer["lin"]
        h = (h - mean) / jnp.sqrt(var + _BN_EPS) * gamma + beta
        h = h @ w.T + b
        if i < len(raw) - 1:
            h = jnp.maximum(h, 0.0)
    return max_action * jnp.tanh(h)


# ---------------------------------------------------------------------------
# Demo
# ---------------------------------------------------------------------------
if __name__ == "__main__":
    action_dim = 4
    conv_output_dim = 32

    key = jax.random.PRNGKey(0)
    key, kx1, kx2, kp = jax.random.split(key, 4)

    raw = init_actor_params(kp, conv_output_dim, action_dim)
    packed = pack_actor_params(raw)

    # --- test 1: tiny batch, single tile, max_action == 1.0 (scale skipped) --
    x1 = jax.random.normal(kx1, (2, 2, 4, 4), jnp.float32)   # flattens to (2, 32)
    fwd1 = jax.jit(partial(actor_forward,
                           conv_output_dim=conv_output_dim,
                           action_dim=action_dim,
                           max_action=1.0))
    a1 = fwd1(packed, x1)
    jax.block_until_ready(a1)
    assert a1.shape == (2, action_dim)
    assert a1.dtype == jnp.float32
    r1 = actor_reference(raw, x1, conv_output_dim=conv_output_dim, max_action=1.0)
    assert jnp.allclose(a1, r1, atol=5e-2, rtol=5e-2), (a1, r1)

    # --- test 2: multi-tile grid with a partial last tile, max_action != 1.0 --
    x2 = jax.random.normal(kx2, (40, 2, 4, 4), jnp.float32)  # flattens to (40, 32)
    fwd2 = jax.jit(partial(actor_forward,
                           conv_output_dim=conv_output_dim,
                           action_dim=action_dim,
                           max_action=2.0,
                           batch_tile=16))                   # forces grid=3, tail tile
    a2 = fwd2(packed, x2)
    jax.block_until_ready(a2)
    assert a2.shape == (40, action_dim)
    assert a2.dtype == jnp.float32
    r2 = actor_reference(raw, x2, conv_output_dim=conv_output_dim, max_action=2.0)
    assert jnp.allclose(a2, r2, atol=5e-2, rtol=5e-2), (a2, r2)

    print("KERNEL_OK")
</pallas_src>

<mosaic_0001>
module attributes {stable_mosaic.version = 11 : i64} {
  func.func @_actor_kernel(%arg0: i32, %arg1: memref<2x32xf32, #tpu.memory_space<vmem>>, %arg2: memref<32x256xbf16, #tpu.memory_space<vmem>>, %arg3: memref<1x256xf32, #tpu.memory_space<vmem>>, %arg4: memref<256x256xbf16, #tpu.memory_space<vmem>>, %arg5: memref<1x256xf32, #tpu.memory_space<vmem>>, %arg6: memref<256x128xbf16, #tpu.memory_space<vmem>>, %arg7: memref<1x128xf32, #tpu.memory_space<vmem>>, %arg8: memref<2x128xbf16, #tpu.memory_space<vmem>>) attributes {dimension_semantics = [#tpu.dimension_semantics<parallel>], iteration_bounds = array<i64: 1>, scalar_prefetch = 0 : i64, scratch_operands = 0 : i64, tpu.core_type = #tpu.core_type<tc>, window_params = [{transform_indices = @transform_0, window_bounds = array<i64: 2, 32>}, {pipeline_mode = #tpu.pipeline_mode<synchronous>, transform_indices = @transform_1, window_bounds = array<i64: 32, 256>}, {pipeline_mode = #tpu.pipeline_mode<synchronous>, transform_indices = @transform_2, window_bounds = array<i64: 1, 256>}, {pipeline_mode = #tpu.pipeline_mode<synchronous>, transform_indices = @transform_3, window_bounds = array<i64: 256, 256>}, {pipeline_mode = #tpu.pipeline_mode<synchronous>, transform_indices = @transform_4, window_bounds = array<i64: 1, 256>}, {pipeline_mode = #tpu.pipeline_mode<synchronous>, transform_indices = @transform_5, window_bounds = array<i64: 256, 128>}, {pipeline_mode = #tpu.pipeline_mode<synchronous>, transform_indices = @transform_6, window_bounds = array<i64: 1, 128>}, {transform_indices = @transform_7, window_bounds = array<i64: 2, 128>}]} {
    %c0 = arith.constant 0 : index
    %c0_0 = arith.constant 0 : index
    %0 = vector.load %arg1[%c0, %c0_0] : memref<2x32xf32, #tpu.memory_space<vmem>>, vector<2x32xf32>
    %1 = arith.truncf %0 : vector<2x32xf32> to vector<2x32xbf16>
    %c0_1 = arith.constant 0 : index
    %c0_2 = arith.constant 0 : index
    %2 = vector.load %arg2[%c0_1, %c0_2] : memref<32x256xbf16, #tpu.memory_space<vmem>>, vector<32x256xbf16>
    %cst = arith.constant dense<0.000000e+00> : vector<2x256xf32>
    %3 = tpu.matmul %1, %2, %cst {dimension_numbers = #tpu.dot_dimension_numbers<[1], [0], [0], [1], [0, 0, 1, 1], [], []>} : vector<2x32xbf16>, vector<32x256xbf16>, vector<2x256xf32> -> vector<2x256xf32>
    %c0_3 = arith.constant 0 : index
    %c0_4 = arith.constant 0 : index
    %4 = vector.load %arg3[%c0_3, %c0_4] : memref<1x256xf32, #tpu.memory_space<vmem>>, vector<1x256xf32>
    %5 = vector.broadcast %4 : vector<1x256xf32> to vector<2x256xf32>
    %6 = arith.addf %3, %5 : vector<2x256xf32>
    %cst_5 = arith.constant 0.000000e+00 : f32
    %7 = vector.broadcast %cst_5 : f32 to vector<2x256xf32>
    %8 = arith.maximumf %6, %7 : vector<2x256xf32>
    %9 = arith.truncf %8 : vector<2x256xf32> to vector<2x256xbf16>
    %c0_6 = arith.constant 0 : index
    %c0_7 = arith.constant 0 : index
    %10 = vector.load %arg4[%c0_6, %c0_7] : memref<256x256xbf16, #tpu.memory_space<vmem>>, vector<256x256xbf16>
    %cst_8 = arith.constant dense<0.000000e+00> : vector<2x256xf32>
    %11 = tpu.matmul %9, %10, %cst_8 {dimension_numbers = #tpu.dot_dimension_numbers<[1], [0], [0], [1], [0, 0, 1, 1], [], []>} : vector<2x256xbf16>, vector<256x256xbf16>, vector<2x256xf32> -> vector<2x256xf32>
    %c0_9 = arith.constant 0 : index
    %c0_10 = arith.constant 0 : index
    %12 = vector.load %arg5[%c0_9, %c0_10] : memref<1x256xf32, #tpu.memory_space<vmem>>, vector<1x256xf32>
    %13 = vector.broadcast %12 : vector<1x256xf32> to vector<2x256xf32>
    %14 = arith.addf %11, %13 : vector<2x256xf32>
    %cst_11 = arith.constant 0.000000e+00 : f32
    %15 = vector.broadcast %cst_11 : f32 to vector<2x256xf32>
    %16 = arith.maximumf %14, %15 : vector<2x256xf32>
    %17 = arith.truncf %16 : vector<2x256xf32> to vector<2x256xbf16>
    %c0_12 = arith.constant 0 : index
    %c0_13 = arith.constant 0 : index
    %18 = vector.load %arg6[%c0_12, %c0_13] : memref<256x128xbf16, #tpu.memory_space<vmem>>, vector<256x128xbf16>
    %cst_14 = arith.constant dense<0.000000e+00> : vector<2x128xf32>
    %19 = tpu.matmul %17, %18, %cst_14 {dimension_numbers = #tpu.dot_dimension_numbers<[1], [0], [0], [1], [0, 0, 1, 1], [], []>} : vector<2x256xbf16>, vector<256x128xbf16>, vector<2x128xf32> -> vector<2x128xf32>
    %c0_15 = arith.constant 0 : index
    %c0_16 = arith.constant 0 : index
    %20 = vector.load %arg7[%c0_15, %c0_16] : memref<1x128xf32, #tpu.memory_space<vmem>>, vector<1x128xf32>
    %21 = vector.broadcast %20 : vector<1x128xf32> to vector<2x128xf32>
    %22 = arith.addf %19, %21 : vector<2x128xf32>
    %23 = math.tanh %22 : vector<2x128xf32>
    %24 = arith.truncf %23 : vector<2x128xf32> to vector<2x128xbf16>
    %c0_17 = arith.constant 0 : index
    %c0_18 = arith.constant 0 : index
    %25 = vector.load %arg8[%c0_17, %c0_18] : memref<2x128xbf16, #tpu.memory_space<vmem>>, vector<2x128xbf16>
    tpu.vector_store %arg8[%c0_17, %c0_18], %24 {strides = array<i32>} : memref<2x128xbf16, #tpu.memory_space<vmem>>, vector<2x128xbf16>,
    return
  }
  func.func @transform_0(%arg0: i32) -> (i32, i32) {
    %c0_i32 = arith.constant 0 : i32
    %c0_i32_0 = arith.constant 0 : i32
    return %arg0, %c0_i32 : i32, i32
  }
  func.func @transform_1(%arg0: i32) -> (i32, i32) {
    %c0_i32 = arith.constant 0 : i32
    %c0_i32_0 = arith.constant 0 : i32
    %c0_i32_1 = arith.constant 0 : i32
    return %c0_i32, %c0_i32_0 : i32, i32
  }
  func.func @transform_2(%arg0: i32) -> (i32, i32) {
    %c0_i32 = arith.constant 0 : i32
    %c0_i32_0 = arith.constant 0 : i32
    %c0_i32_1 = arith.constant 0 : i32
    return %c0_i32, %c0_i32_0 : i32, i32
  }
  func.func @transform_3(%arg0: i32) -> (i32, i32) {
    %c0_i32 = arith.constant 0 : i32
    %c0_i32_0 = arith.constant 0 : i32
    %c0_i32_1 = arith.constant 0 : i32
    return %c0_i32, %c0_i32_0 : i32, i32
  }
  func.func @transform_4(%arg0: i32) -> (i32, i32) {
    %c0_i32 = arith.constant 0 : i32
    %c0_i32_0 = arith.constant 0 : i32
    %c0_i32_1 = arith.constant 0 : i32
    return %c0_i32, %c0_i32_0 : i32, i32
  }
  func.func @transform_5(%arg0: i32) -> (i32, i32) {
    %c0_i32 = arith.constant 0 : i32
    %c0_i32_0 = arith.constant 0 : i32
    %c0_i32_1 = arith.constant 0 : i32
    return %c0_i32, %c0_i32_0 : i32, i32
  }
  func.func @transform_6(%arg0: i32) -> (i32, i32) {
    %c0_i32 = arith.constant 0 : i32
    %c0_i32_0 = arith.constant 0 : i32
    %c0_i32_1 = arith.constant 0 : i32
    return %c0_i32, %c0_i32_0 : i32, i32
  }
  func.func @transform_7(%arg0: i32) -> (i32, i32) {
    %c0_i32 = arith.constant 0 : i32
    %c0_i32_0 = arith.constant 0 : i32
    return %arg0, %c0_i32 : i32, i32
  }
}

</mosaic_0001>

<llo_original>
// kernel: actor_forward.1
$region0: #{actor_forward.1}
  #allocation0 [shape = 'u32[]', space=smem, size = 0x4, offset = 0x4, fixed_abs, tag = 'smem constant byte address 0x4 - core index']
  #allocation1 [shape = 'u32[72,128]{1,0:T(1,128)}', space=vmem, size = 0x9000, scoped, tag = 'internal scratch']
  %s0 = inlined_call_operand.vmem [shape: f32[2,32], index: 0, kind: input, shape index: {}]
  %s1 = inlined_call_operand.hbm [shape: bf16[32,256], index: 1, kind: input, shape index: {}]
  %s2 = inlined_call_operand.vmem [shape: f32[1,256], index: 2, kind: input, shape index: {}]
  %s3 = inlined_call_operand.hbm [shape: bf16[256,256], index: 3, kind: input, shape index: {}]
  %s4 = inlined_call_operand.vmem [shape: f32[1,256], index: 4, kind: input, shape index: {}]
  %s5 = inlined_call_operand.hbm [shape: bf16[256,128], index: 5, kind: input, shape index: {}]
  %s6 = inlined_call_operand.vmem [shape: f32[1,128], index: 6, kind: input, shape index: {}]
  %s7 = inlined_call_operand.vmem [shape: bf16[2,128], index: 7, kind: output, shape index: {}]
  %s8 = sld [smem:[#allocation0]]
  $region50: #{actor_forward.1} parent=0
    _
  %s10 = ssub.s32 1, %s8
  %s11 = scalar_select 0, %s10, %s8
  $region1: #{actor_forward.1} parent=0
    #allocation2 [shape = 'u8[16384]{0}', space=vmem, size = 0x4000, scoped, tag = 'input window, operand 1, single buffered']
    #allocation3 [shape = 's32[1]{0}', space=sflag, size = 0x4, scoped, tag = 'scoped memory for actor_forward.1']
    #allocation4 [shape = 'u8[131072]{0}', space=vmem, size = 0x20000, scoped, tag = 'input window, operand 3, single buffered']
    #allocation5 [shape = 's32[1]{0}', space=sflag, size = 0x4, scoped, tag = 'scoped memory for actor_forward.1']
    #allocation6 [shape = 'u8[65536]{0}', space=vmem, size = 0x10000, scoped, tag = 'input window, operand 5, single buffered']
    %12 = vsyncpa [#allocation3], 0
    %13 = vsyncpa [#allocation5], 0
    // Predicated region
    $region2: #{actor_forward.1} parent=1 // pred_check
      _
    $region3: #{actor_forward.1} parent=1 // pred_check_branch
      %15 = sbr.rel (0) target = $region5
    $region4: #{actor_forward.1} parent=1 // pred_region
      _
    $region5: #{actor_forward.1} parent=1 // pred_fallthru
      _
    // Predicated region
    $region6: #{actor_forward.1} parent=1 // pred_check
      _
    $region7: #{actor_forward.1} parent=1 // pred_check_branch
      %17 = sbr.rel (0) target = $region9
    $region8: #{actor_forward.1} parent=1 // pred_region
      %19 = vsyncadd [#allocation3], 0
      %s20 = sshll.u32 %s1, 4
      %s21 = int_to_ptr.hbm [resolvable:$true] %s20
      %s22 = sshll.u32 [#allocation2], 4
      %s23 = int_to_ptr.vmem [resolvable:$true] %s22
      %28 = dma.hbm_to_vmem [thread:$0]  %s21, 512, %s23, [#allocation3], 128, 128, 8
    $region9: #{actor_forward.1} parent=1 // pred_fallthru
      _
    // Predicated region
    $region10: #{actor_forward.1} parent=1 // pred_check
      _
    $region11: #{actor_forward.1} parent=1 // pred_check_branch
      %30 = sbr.rel (0) target = $region13
    $region12: #{actor_forward.1} parent=1 // pred_region
      _
    $region13: #{actor_forward.1} parent=1 // pred_fallthru
      _
    // Predicated region
    $region14: #{actor_forward.1} parent=1 // pred_check
      _
    $region15: #{actor_forward.1} parent=1 // pred_check_branch
      %32 = sbr.rel (0) target = $region17
    $region16: #{actor_forward.1} parent=1 // pred_region
      %34 = vsyncadd [#allocation5], 0
      %s35 = sshll.u32 %s3, 4
      %s36 = int_to_ptr.hbm [resolvable:$true] %s35
      %s37 = sshll.u32 [#allocation4], 4
      %s38 = int_to_ptr.vmem [resolvable:$true] %s37
      %43 = dma.hbm_to_vmem [thread:$0]  %s36, 4096, %s38, [#allocation5], 128, 128, 8
    $region17: #{actor_forward.1} parent=1 // pred_fallthru
      _
    // Predicated region
    $region18: #{actor_forward.1} parent=1 // pred_check
      _
    $region19: #{actor_forward.1} parent=1 // pred_check_branch
      %45 = sbr.rel (0) target = $region21
    $region20: #{actor_forward.1} parent=1 // pred_region
      _
    $region21: #{actor_forward.1} parent=1 // pred_fallthru
      _
    // Predicated region
    $region22: #{actor_forward.1} parent=1 // pred_check
      _
    $region23: #{actor_forward.1} parent=1 // pred_check_branch
      %47 = sbr.rel (0) target = $region25
    $region24: #{actor_forward.1} parent=1 // pred_region
      %49 = vsyncadd [#allocation5], 0
      %s50 = sshll.u32 %s5, 4
      %s51 = int_to_ptr.hbm [resolvable:$true] %s50
      %s52 = sshll.u32 [#allocation6], 4
      %s53 = int_to_ptr.vmem [resolvable:$true] %s52
      %58 = dma.hbm_to_vmem [thread:$0]  %s51, 2048, %s53, [#allocation5], 64, 64, 4
    $region25: #{actor_forward.1} parent=1 // pred_fallthru
      _
    // Predicated region
    $region26: #{actor_forward.1} parent=1 // pred_check
      _
    $region27: #{actor_forward.1} parent=1 // pred_check_branch
      %60 = sbr.rel (0) target = $region29
    $region28: #{actor_forward.1} parent=1 // pred_region
      _
    $region29: #{actor_forward.1} parent=1 // pred_fallthru
      _
    // Predicated region
    $region30: #{actor_forward.1} parent=1 // pred_check
      _
    $region31: #{actor_forward.1} parent=1 // pred_check_branch
      %62 = sbr.rel (0) target = $region33
    $region32: #{actor_forward.1} parent=1 // pred_region
      %64 = dma.done [#allocation3], 512
    $region33: #{actor_forward.1} parent=1 // pred_fallthru
      _
    // Predicated region
    $region34: #{actor_forward.1} parent=1 // pred_check
      _
    $region35: #{actor_forward.1} parent=1 // pred_check_branch
      %66 = sbr.rel (0) target = $region37
    $region36: #{actor_forward.1} parent=1 // pred_region
      %68 = dma.done [#allocation5], 4096
    $region37: #{actor_forward.1} parent=1 // pred_fallthru
      _
    // Predicated region
    $region38: #{actor_forward.1} parent=1 // pred_check
      _
    $region39: #{actor_forward.1} parent=1 // pred_check_branch
      %70 = sbr.rel (0) target = $region41
    $region40: #{actor_forward.1} parent=1 // pred_region
      %72 = dma.done [#allocation5], 2048
    $region41: #{actor_forward.1} parent=1 // pred_fallthru
      _
    %v74 = vld [vmem:[%s0] sm:$0x3]
    %v75 = vpack.c.bf16 %v74, %v74
    %v76 = vld [vmem:[#allocation2] sm:$0xff]
    %v77 = vld [vmem:[#allocation2 + $0x8] sm:$0xff]
    %v78 = vld [vmem:[#allocation2 + $0x10] sm:$0xff]
    %v79 = vld [vmem:[#allocation2 + $0x18] sm:$0xff]
    %v80 = vld [vmem:[%s2] sm:$0x3]
    %v82 = vperm.slane %v80, 0
    %v83 = vperm.slane %v80, 1
    %v90 = vunpack.c.l.b16 %v76
    %v91 = vunpack.c.h.b16 %v76
    %v92 = vunpack.c.l.b16 %v77
    %v93 = vunpack.c.h.b16 %v77
    %v94 = vunpack.c.l.b16 %v78
    %v95 = vunpack.c.h.b16 %v78
    %v96 = vunpack.c.l.b16 %v79
    %v97 = vunpack.c.h.b16 %v79
    %v98 = vpack.c.b16 %v92, %v90
    %v99 = vpack.c.b16 %v93, %v91
    %v100 = vpack.c.b16 %v96, %v94
    %v101 = vpack.c.b16 %v97, %v95
    %vm106 = vcmask 261120
    %v108 = vsel %vm106, %v75, 0
    %110 = vmatpush.bf16.msra.mxu0 0
    %111 = vmatpush.bf16.msra.mxu0 0
    %112 = vmatpush.bf16.msra.mxu0 0
    %113 = vmatpush.bf16.msra.mxu0 0
    %114 = vmatpush.bf16.msra.mxu0 0
    %115 = vmatpush.bf16.msra.mxu0 0
    %116 = vmatpush.bf16.msra.mxu0 %v100
    %117 = vmatpush.bf16.msra.mxu0 %v98
    %118 = vmatmul.bf16.gmra.mxu0 %v108
    %v119 = vpop.f32.mrf.mxu0
    %v120 = vadd.f32 %v82, %v119
    %v121 = vpop.f32.mrf.mxu0
    %122 = vdwg.mxu0
    %123 = vmatpush.bf16.msra.mxu0 0
    %124 = vmatpush.bf16.msra.mxu0 0
    %125 = vmatpush.bf16.msra.mxu0 0
    %126 = vmatpush.bf16.msra.mxu0 0
    %127 = vmatpush.bf16.msra.mxu0 0
    %128 = vmatpush.bf16.msra.mxu0 0
    %129 = vmatpush.bf16.msra.mxu0 %v101
    %130 = vmatpush.bf16.msra.mxu0 %v99
    %131 = vmatmul.bf16.gmra.mxu0 %v108
    %v132 = vpop.f32.mrf.mxu0
    %v133 = vadd.f32 %v83, %v132
    %v134 = vpop.f32.mrf.mxu0
    %135 = vdwg.mxu0
    %v136 = vmax.f32 %v120, 0.0
    %v137 = vmax.f32 %v133, 0.0
    %v138 = vpack.c.bf16 %v136, %v136
    %v139 = vpack.c.bf16 %v137, %v137
    %v140 = vld [vmem:[#allocation4] sm:$0xff]
    %v141 = vld [vmem:[#allocation4 + $0x8] sm:$0xff]
    %v142 = vld [vmem:[#allocation4 + $0x10] sm:$0xff]
    %v143 = vld [vmem:[#allocation4 + $0x18] sm:$0xff]
    %v144 = vld [vmem:[#allocation4 + $0x20] sm:$0xff]
    %v145 = vld [vmem:[#allocation4 + $0x28] sm:$0xff]
    %v146 = vld [vmem:[#allocation4 + $0x30] sm:$0xff]
    %v147 = vld [vmem:[#allocation4 + $0x38] sm:$0xff]
    %v148 = vld [vmem:[#allocation4 + $0x40] sm:$0xff]
    %v149 = vld [vmem:[#allocation4 + $0x48] sm:$0xff]
    %v150 = vld [vmem:[#allocation4 + $0x50] sm:$0xff]
    %v151 = vld [vmem:[#allocation4 + $0x58] sm:$0xff]
    %v152 = vld [vmem:[#allocation4 + $0x60] sm:$0xff]
    %v153 = vld [vmem:[#allocation4 + $0x68] sm:$0xff]
    %v154 = vld [vmem:[#allocation4 + $0x70] sm:$0xff]
    %v155 = vld [vmem:[#allocation4 + $0x78] sm:$0xff]
    %v156 = vld [vmem:[#allocation4 + $0x80] sm:$0xff]
    %v157 = vld [vmem:[#allocation4 + $0x88] sm:$0xff]
    %v158 = vld [vmem:[#allocation4 + $0x90] sm:$0xff]
    %v159 = vld [vmem:[#allocation4 + $0x98] sm:$0xff]
    %v160 = vld [vmem:[#allocation4 + $0xa0] sm:$0xff]
    %v161 = vld [vmem:[#allocation4 + $0xa8] sm:$0xff]
    %v162 = vld [vmem:[#allocation4 + $0xb0] sm:$0xff]
    %v163 = vld [vmem:[#allocation4 + $0xb8] sm:$0xff]
    %v164 = vld [vmem:[#allocation4 + $0xc0] sm:$0xff]
    %v165 = vld [vmem:[#allocation4 + $0xc8] sm:$0xff]
    %v166 = vld [vmem:[#allocation4 + $0xd0] sm:$0xff]
    %v167 = vld [vmem:[#allocation4 + $0xd8] sm:$0xff]
    %v168 = vld [vmem:[#allocation4 + $0xe0] sm:$0xff]
    %v169 = vld [vmem:[#allocation4 + $0xe8] sm:$0xff]
    %v170 = vld [vmem:[#allocation4 + $0xf0] sm:$0xff]
    %v171 = vld [vmem:[#allocation4 + $0xf8] sm:$0xff]
    %v172 = vld [vmem:[%s4] sm:$0x3]
    %v174 = vperm.slane %v172, 0
    %v175 = vperm.slane %v172, 1
    %v210 = vunpack.c.l.b16 %v140
    %v211 = vunpack.c.h.b16 %v140
    %v212 = vunpack.c.l.b16 %v141
    %v213 = vunpack.c.h.b16 %v141
    %v214 = vunpack.c.l.b16 %v142
    %v215 = vunpack.c.h.b16 %v142
    %v216 = vunpack.c.l.b16 %v143
    %v217 = vunpack.c.h.b16 %v143
    %v218 = vunpack.c.l.b16 %v144
    %v219 = vunpack.c.h.b16 %v144
    %v220 = vunpack.c.l.b16 %v145
    %v221 = vunpack.c.h.b16 %v145
    %v222 = vunpack.c.l.b16 %v146
    %v223 = vunpack.c.h.b16 %v146
    %v224 = vunpack.c.l.b16 %v147
    %v225 = vunpack.c.h.b16 %v147
    %v226 = vunpack.c.l.b16 %v148
    %v227 = vunpack.c.h.b16 %v148
    %v228 = vunpack.c.l.b16 %v149
    %v229 = vunpack.c.h.b16 %v149
    %v230 = vunpack.c.l.b16 %v150
    %v231 = vunpack.c.h.b16 %v150
    %v232 = vunpack.c.l.b16 %v151
    %v233 = vunpack.c.h.b16 %v151
    %v234 = vunpack.c.l.b16 %v152
    %v235 = vunpack.c.h.b16 %v152
    %v236 = vunpack.c.l.b16 %v153
    %v237 = vunpack.c.h.b16 %v153
    %v238 = vunpack.c.l.b16 %v154
    %v239 = vunpack.c.h.b16 %v154
    %v240 = vunpack.c.l.b16 %v155
    %v241 = vunpack.c.h.b16 %v155
    %v242 = vunpack.c.l.b16 %v156
    %v243 = vunpack.c.h.b16 %v156
    %v244 = vunpack.c.l.b16 %v157
    %v245 = vunpack.c.h.b16 %v157
    %v246 = vunpack.c.l.b16 %v158
    %v247 = vunpack.c.h.b16 %v158
    %v248 = vunpack.c.l.b16 %v159
    %v249 = vunpack.c.h.b16 %v159
    %v250 = vunpack.c.l.b16 %v160
    %v251 = vunpack.c.h.b16 %v160
    %v252 = vunpack.c.l.b16 %v161
    %v253 = vunpack.c.h.b16 %v161
    %v254 = vunpack.c.l.b16 %v162
    %v255 = vunpack.c.h.b16 %v162
    %v256 = vunpack.c.l.b16 %v163
    %v257 = vunpack.c.h.b16 %v163
    %v258 = vunpack.c.l.b16 %v164
    %v259 = vunpack.c.h.b16 %v164
    %v260 = vunpack.c.l.b16 %v165
    %v261 = vunpack.c.h.b16 %v165
    %v262 = vunpack.c.l.b16 %v166
    %v263 = vunpack.c.h.b16 %v166
    %v264 = vunpack.c.l.b16 %v167
    %v265 = vunpack.c.h.b16 %v167
    %v266 = vunpack.c.l.b16 %v168
    %v267 = vunpack.c.h.b16 %v168
    %v268 = vunpack.c.l.b16 %v169
    %v269 = vunpack.c.h.b16 %v169
    %v270 = vunpack.c.l.b16 %v170
    %v271 = vunpack.c.h.b16 %v170
    %v272 = vunpack.c.l.b16 %v171
    %v273 = vunpack.c.h.b16 %v171
    %v274 = vpack.c.b16 %v212, %v210
    %v275 = vpack.c.b16 %v213, %v211
    %v276 = vpack.c.b16 %v216, %v214
    %v277 = vpack.c.b16 %v217, %v215
    %v278 = vpack.c.b16 %v220, %v218
    %v279 = vpack.c.b16 %v221, %v219
    %v280 = vpack.c.b16 %v224, %v222
    %v281 = vpack.c.b16 %v225, %v223
    %v282 = vpack.c.b16 %v228, %v226
    %v283 = vpack.c.b16 %v229, %v227
    %v284 = vpack.c.b16 %v232, %v230
    %v285 = vpack.c.b16 %v233, %v231
    %v286 = vpack.c.b16 %v236, %v234
    %v287 = vpack.c.b16 %v237, %v235
    %v288 = vpack.c.b16 %v240, %v238
    %v289 = vpack.c.b16 %v241, %v239
    %v290 = vpack.c.b16 %v244, %v242
    %v291 = vpack.c.b16 %v245, %v243
    %v292 = vpack.c.b16 %v248, %v246
    %v293 = vpack.c.b16 %v249, %v247
    %v294 = vpack.c.b16 %v252, %v250
    %v295 = vpack.c.b16 %v253, %v251
    %v296 = vpack.c.b16 %v256, %v254
    %v297 = vpack.c.b16 %v257, %v255
    %v298 = vpack.c.b16 %v260, %v258
    %v299 = vpack.c.b16 %v261, %v259
    %v300 = vpack.c.b16 %v264, %v262
    %v301 = vpack.c.b16 %v265, %v263
    %v302 = vpack.c.b16 %v268, %v266
    %v303 = vpack.c.b16 %v269, %v267
    %v304 = vpack.c.b16 %v272, %v270
    %v305 = vpack.c.b16 %v273, %v271
    %338 = vmatpush.bf16.msra.mxu0 %v288
    %339 = vmatpush.bf16.msra.mxu0 %v286
    %340 = vmatpush.bf16.msra.mxu0 %v284
    %341 = vmatpush.bf16.msra.mxu0 %v282
    %342 = vmatpush.bf16.msra.mxu0 %v280
    %343 = vmatpush.bf16.msra.mxu0 %v278
    %344 = vmatpush.bf16.msra.mxu0 %v276
    %345 = vmatpush.bf16.msra.mxu0 %v274
    %346 = vmatmul.bf16.gmra.mxu0 %v138
    %v347 = vpop.f32.mrf.mxu0
    %v348 = vadd.f32 %v174, %v347
    %v349 = vpop.f32.mrf.mxu0
    %350 = vdwg.mxu0
    %351 = vmatpush.bf16.msra.mxu0 %v304
    %352 = vmatpush.bf16.msra.mxu0 %v302
    %353 = vmatpush.bf16.msra.mxu0 %v300
    %354 = vmatpush.bf16.msra.mxu0 %v298
    %355 = vmatpush.bf16.msra.mxu0 %v296
    %356 = vmatpush.bf16.msra.mxu0 %v294
    %357 = vmatpush.bf16.msra.mxu0 %v292
    %358 = vmatpush.bf16.msra.mxu0 %v290
    %359 = vmatmul.bf16.gmra.mxu0 %v139
    %v360 = vpop.f32.mrf.mxu0
    %v361 = vadd.f32 %v348, %v360
    %v362 = vpop.f32.mrf.mxu0
    %363 = vdwg.mxu0
    %364 = vmatpush.bf16.msra.mxu0 %v289
    %365 = vmatpush.bf16.msra.mxu0 %v287
    %366 = vmatpush.bf16.msra.mxu0 %v285
    %367 = vmatpush.bf16.msra.mxu0 %v283
    %368 = vmatpush.bf16.msra.mxu0 %v281
    %369 = vmatpush.bf16.msra.mxu0 %v279
    %370 = vmatpush.bf16.msra.mxu0 %v277
    %371 = vmatpush.bf16.msra.mxu0 %v275
    %372 = vmatmul.bf16.gmra.mxu0 %v138
    %v373 = vpop.f32.mrf.mxu0
    %v374 = vadd.f32 %v175, %v373
    %v375 = vpop.f32.mrf.mxu0
    %376 = vdwg.mxu0
    %377 = vmatpush.bf16.msra.mxu0 %v305
    %378 = vmatpush.bf16.msra.mxu0 %v303
    %379 = vmatpush.bf16.msra.mxu0 %v301
    %380 = vmatpush.bf16.msra.mxu0 %v299
    %381 = vmatpush.bf16.msra.mxu0 %v297
    %382 = vmatpush.bf16.msra.mxu0 %v295
    %383 = vmatpush.bf16.msra.mxu0 %v293
    %384 = vmatpush.bf16.msra.mxu0 %v291
    %385 = vmatmul.bf16.gmra.mxu0 %v139
    %v386 = vpop.f32.mrf.mxu0
    %v387 = vadd.f32 %v374, %v386
    %v388 = vpop.f32.mrf.mxu0
    %389 = vdwg.mxu0
    %v390 = vmax.f32 %v361, 0.0
    %v391 = vmax.f32 %v387, 0.0
    %v392 = vpack.c.bf16 %v390, %v390
    %v393 = vpack.c.bf16 %v391, %v391
    %v394 = vld [vmem:[#allocation6] sm:$0xf]
    %v395 = vld [vmem:[#allocation6 + $0x4] sm:$0xf]
    %v396 = vld [vmem:[#allocation6 + $0x8] sm:$0xf]
    %v397 = vld [vmem:[#allocation6 + $0xc] sm:$0xf]
    %v398 = vld [vmem:[#allocation6 + $0x10] sm:$0xf]
    %v399 = vld [vmem:[#allocation6 + $0x14] sm:$0xf]
    %v400 = vld [vmem:[#allocation6 + $0x18] sm:$0xf]
    %v401 = vld [vmem:[#allocation6 + $0x1c] sm:$0xf]
    %v402 = vld [vmem:[#allocation6 + $0x20] sm:$0xf]
    %v403 = vld [vmem:[#allocation6 + $0x24] sm:$0xf]
    %v404 = vld [vmem:[#allocation6 + $0x28] sm:$0xf]
    %v405 = vld [vmem:[#allocation6 + $0x2c] sm:$0xf]
    %v406 = vld [vmem:[#allocation6 + $0x30] sm:$0xf]
    %v407 = vld [vmem:[#allocation6 + $0x34] sm:$0xf]
    %v408 = vld [vmem:[#allocation6 + $0x38] sm:$0xf]
    %v409 = vld [vmem:[#allocation6 + $0x3c] sm:$0xf]
    %v410 = vld [vmem:[#allocation6 + $0x40] sm:$0xf]
    %v411 = vld [vmem:[#allocation6 + $0x44] sm:$0xf]
    %v412 = vld [vmem:[#allocation6 + $0x48] sm:$0xf]
    %v413 = vld [vmem:[#allocation6 + $0x4c] sm:$0xf]
    %v414 = vld [vmem:[#allocation6 + $0x50] sm:$0xf]
    %v415 = vld [vmem:[#allocation6 + $0x54] sm:$0xf]
    %v416 = vld [vmem:[#allocation6 + $0x58] sm:$0xf]
    %v417 = vld [vmem:[#allocation6 + $0x5c] sm:$0xf]
    %v418 = vld [vmem:[#allocation6 + $0x60] sm:$0xf]
    %v419 = vld [vmem:[#allocation6 + $0x64] sm:$0xf]
    %v420 = vld [vmem:[#allocation6 + $0x68] sm:$0xf]
    %v421 = vld [vmem:[#allocation6 + $0x6c] sm:$0xf]
    %v422 = vld [vmem:[#allocation6 + $0x70] sm:$0xf]
    %v423 = vld [vmem:[#allocation6 + $0x74] sm:$0xf]
    %v424 = vld [vmem:[#allocation6 + $0x78] sm:$0xf]
    %v425 = vld [vmem:[#allocation6 + $0x7c] sm:$0xf]
    %v426 = vld [vmem:[%s6] sm:$0x1]
    %v428 = vperm.slane %v426, 0
    %v462 = vunpack.c.l.b16 %v394
    %v463 = vunpack.c.l.b16 %v395
    %v464 = vunpack.c.l.b16 %v396
    %v465 = vunpack.c.l.b16 %v397
    %v466 = vunpack.c.l.b16 %v398
    %v467 = vunpack.c.l.b16 %v399
    %v468 = vunpack.c.l.b16 %v400
    %v469 = vunpack.c.l.b16 %v401
    %v470 = vunpack.c.l.b16 %v402
    %v471 = vunpack.c.l.b16 %v403
    %v472 = vunpack.c.l.b16 %v404
    %v473 = vunpack.c.l.b16 %v405
    %v474 = vunpack.c.l.b16 %v406
    %v475 = vunpack.c.l.b16 %v407
    %v476 = vunpack.c.l.b16 %v408
    %v477 = vunpack.c.l.b16 %v409
    %v478 = vunpack.c.l.b16 %v410
    %v479 = vunpack.c.l.b16 %v411
    %v480 = vunpack.c.l.b16 %v412
    %v481 = vunpack.c.l.b16 %v413
    %v482 = vunpack.c.l.b16 %v414
    %v483 = vunpack.c.l.b16 %v415
    %v484 = vunpack.c.l.b16 %v416
    %v485 = vunpack.c.l.b16 %v417
    %v486 = vunpack.c.l.b16 %v418
    %v487 = vunpack.c.l.b16 %v419
    %v488 = vunpack.c.l.b16 %v420
    %v489 = vunpack.c.l.b16 %v421
    %v490 = vunpack.c.l.b16 %v422
    %v491 = vunpack.c.l.b16 %v423
    %v492 = vunpack.c.l.b16 %v424
    %v493 = vunpack.c.l.b16 %v425
    %v494 = vpack.c.b16 %v463, %v462
    %v495 = vpack.c.b16 %v465, %v464
    %v496 = vpack.c.b16 %v467, %v466
    %v497 = vpack.c.b16 %v469, %v468
    %v498 = vpack.c.b16 %v471, %v470
    %v499 = vpack.c.b16 %v473, %v472
    %v500 = vpack.c.b16 %v475, %v474
    %v501 = vpack.c.b16 %v477, %v476
    %v502 = vpack.c.b16 %v479, %v478
    %v503 = vpack.c.b16 %v481, %v480
    %v504 = vpack.c.b16 %v483, %v482
    %v505 = vpack.c.b16 %v485, %v484
    %v506 = vpack.c.b16 %v487, %v486
    %v507 = vpack.c.b16 %v489, %v488
    %v508 = vpack.c.b16 %v491, %v490
    %v509 = vpack.c.b16 %v493, %v492
    %526 = vmatpush.bf16.msra.mxu0 %v501
    %527 = vmatpush.bf16.msra.mxu0 %v500
    %528 = vmatpush.bf16.msra.mxu0 %v499
    %529 = vmatpush.bf16.msra.mxu0 %v498
    %530 = vmatpush.bf16.msra.mxu0 %v497
    %531 = vmatpush.bf16.msra.mxu0 %v496
    %532 = vmatpush.bf16.msra.mxu0 %v495
    %533 = vmatpush.bf16.msra.mxu0 %v494
    %534 = vmatmul.bf16.gmra.mxu0 %v392
    %v535 = vpop.f32.mrf.mxu0
    %v536 = vadd.f32 %v428, %v535
    %v537 = vpop.f32.mrf.mxu0
    %538 = vdwg.mxu0
    %539 = vmatpush.bf16.msra.mxu0 %v509
    %540 = vmatpush.bf16.msra.mxu0 %v508
    %541 = vmatpush.bf16.msra.mxu0 %v507
    %542 = vmatpush.bf16.msra.mxu0 %v506
    %543 = vmatpush.bf16.msra.mxu0 %v505
    %544 = vmatpush.bf16.msra.mxu0 %v504
    %545 = vmatpush.bf16.msra.mxu0 %v503
    %546 = vmatpush.bf16.msra.mxu0 %v502
    %547 = vmatmul.bf16.gmra.mxu0 %v393
    %v548 = vpop.f32.mrf.mxu0
    %v549 = vadd.f32 %v536, %v548
    %v550 = vpop.f32.mrf.mxu0
    %551 = vdwg.mxu0
    %v552 = vtanh.pop %v549
    %v553 = vpack.c.bf16 %v552, %v552
    %554 = vst [vmem:[%s7] sm:$0x1] %v553
    // Predicated region
    $region42: #{actor_forward.1} parent=1 // pred_check
      _
    $region43: #{actor_forward.1} parent=1 // pred_check_branch
      %556 = sbr.rel (0) target = $region45
    $region44: #{actor_forward.1} parent=1 // pred_region
      _
    $region45: #{actor_forward.1} parent=1 // pred_fallthru
      _
    // Predicated region
    $region46: #{actor_forward.1} parent=1 // pred_check
      _
    $region47: #{actor_forward.1} parent=1 // pred_check_branch
      %558 = sbr.rel (0) target = $region49
    $region48: #{actor_forward.1} parent=1 // pred_region
      _
    $region49: #{actor_forward.1} parent=1 // pred_fallthru
      _
    %559 = vsyncpa [#allocation3], 1
    %560 = vsyncpa [#allocation5], 1

</llo_original>
